<compile_context>
chip_gen: v6e
topology: v6e:2x2x1
jax: 0.10.0
libtpu: 0.0.40
codegen_flags: <defaults>
</compile_context>

<pallas_src>
import functools

import jax
import jax.numpy as jnp
from jax.experimental import pallas as pl
from jax.experimental.pallas import tpu as pltpu


# ---------------------------------------------------------------------------
# Kernel
# ---------------------------------------------------------------------------
def _mc_head_kernel(orig_cls_ref, grounded_ref, w_pool_ref, b_pool_ref,
                    w_a_ref, w_b_ref, b_cls_ref, logits_ref, acc_ref, *, use_gelu):
    s = pl.program_id(1)

    # s == 0: pooler branch computed once per N-tile; seeds the accumulator with the
    # original-CLS half of the classifier contraction.  bf16 x bf16 MXU matmul, f32 accum.
    @pl.when(s == 0)
    def _init():
        pooled = jnp.dot(orig_cls_ref[...], w_pool_ref[...],
                         preferred_element_type=jnp.float32) + b_pool_ref[...]   # (tN, H) f32
        if use_gelu:
            # electra branch: exact (erf) GELU to match nn.GELU(); trailing dropout = identity.
            pooled = jax.nn.gelu(pooled, approximate=False)
        else:
            pooled = jnp.tanh(pooled)
        acc_ref[...] = jnp.dot(pooled, w_a_ref[...],
                               preferred_element_type=jnp.float32)               # (tN, 1)

    # Every s-step: stream one (tN, tS, H) grounded tile; fuse mean-over-seq with the grounded
    # half of the classifier (w_b pre-scaled by 1/S in the wrapper).  f32 accumulation.
    g = grounded_ref[...].astype(jnp.float32)                                    # (tN, tS, H)
    gsum = jnp.sum(g, axis=1)                                                    # (tN, H)
    acc_ref[...] += jnp.dot(gsum, w_b_ref[...],
                            preferred_element_type=jnp.float32)                  # (tN, 1)

    # Last s-step: add classifier bias (SMEM scalar) and write the tiny output once.
    @pl.when(s == pl.num_programs(1) - 1)
    def _finalize():
        logits_ref[...] = (acc_ref[...] + b_cls_ref[0, 0]).astype(logits_ref.dtype)


# ---------------------------------------------------------------------------
# Tiling helpers
# ---------------------------------------------------------------------------
def _round_up(x, m):
    return ((x + m - 1) // m) * m


def _tpu_generation():
    try:
        kind = jax.devices()[0].device_kind.lower()
    except Exception:
        return "unknown"
    for tag in ("v7", "v6", "v5"):
        if tag in kind:
            return tag
    return "unknown"


# (per grounded stream buffer target bytes, vmem_limit_bytes)
_BUDGETS = {
    "v7": (14 * 1024 * 1024, 48 * 1024 * 1024),   # 64 MiB VMEM/TC: 2x14 MiB + w_pool + slack
    "v6": (20 * 1024 * 1024, 96 * 1024 * 1024),   # 128 MiB VMEM
    "v5": (8 * 1024 * 1024, 64 * 1024 * 1024),    # HBM-bound at ~0.82 TB/s; bigger tiles add little
    "unknown": (8 * 1024 * 1024, 48 * 1024 * 1024),
}


def _pick_divisor_tile(dim, align, max_tile):
    """Largest `align`-aligned divisor of dim that is <= max_tile; full dim if dim small or
    no divisor exists (fallback only used for the N axis, which stays small for this head)."""
    if dim <= max_tile:
        return dim
    cands = [t for t in range(align, min(dim, max_tile) + 1, align) if dim % t == 0]
    return max(cands) if cands else dim


def _pick_seq_tile(dim, align, max_tile):
    """Seq-axis tile. Prefers an aligned divisor of dim (no padding copy); otherwise returns
    max_tile and the caller zero-pads the seq axis (numerically exact: 1/S folds the true S)."""
    if dim <= max_tile:
        return dim
    max_tile = max(align, (max_tile // align) * align)
    cands = [t for t in range(align, max_tile + 1, align) if dim % t == 0]
    if cands and 2 * cands[-1] >= max_tile:
        return cands[-1]
    return max_tile


# ---------------------------------------------------------------------------
# Wrapper
# ---------------------------------------------------------------------------
def mc_head_pallas(orig_cls, grounded, w_pool, b_pool, w_cls, b_cls, *,
                   model_type="roberta", tile_n=None, tile_s=None):
    """Pooler + mean-pool + concat + classifier head of GroundedModelForMultiplceChoice."""
    N, H = orig_cls.shape
    S = grounded.shape[1]

    gen = _tpu_generation()
    per_buffer_target, vmem_limit = _BUDGETS.get(gen, _BUDGETS["unknown"])

    # Pooler path runs in bf16 on the MXU (f32 accumulation inside the kernel).
    orig_cls_in = orig_cls.astype(jnp.bfloat16)                                   # tiny (N, H) cast
    w_pool_in = jnp.asarray(w_pool, jnp.bfloat16)                                 # halves resident VMEM
    b_pool_in = jnp.asarray(b_pool, jnp.float32).reshape(1, H)

    # Classifier weight split; concat order is [original_pooled, grounded_pooled].
    w_cls = jnp.asarray(w_cls, jnp.float32)
    w_a = w_cls[:, :H].T                                                          # (H, 1)
    w_b = w_cls[:, H:].T / jnp.float32(S)                                         # (H, 1), folds 1/S
    b_cls_in = jnp.asarray(b_cls, jnp.float32).reshape(1, 1)

    # NOTE: `grounded` is streamed in the dtype the producer emits (bf16 recommended); casting it
    # here would cost a full extra HBM pass, so the upcast to f32 happens per-tile in-kernel.
    g_itemsize = grounded.dtype.itemsize
    align_s = 16 if g_itemsize == 2 else (32 if g_itemsize == 1 else 8)

    # --- tile_n: generation-aware cap; on v7x guarantee >= 2 N-tiles so both TCs get work. ---
    if tile_n is None:
        cap_n = 256 if gen in ("v6", "v7") else 128
        if gen == "v7" and N >= 16:
            cap_n = min(cap_n, max(8, (N // 2) // 8 * 8))
        tile_n = _pick_divisor_tile(N, 8, cap_n)
    assert N % tile_n == 0, "tile_n must divide N (N = real_bs * num_choice stays small)"

    # --- tile_s: size the streamed grounded tile against the generation VMEM budget, after ---
    # --- subtracting resident bf16 w_pool and the (double-buffered) small operands.        ---
    if tile_s is None:
        resident = (H * H * 2                 # bf16 pooler weight
                    + 2 * tile_n * H * 2      # double-buffered bf16 orig_cls tile
                    + 3 * H * 4               # b_pool, w_a, w_b
                    + 4 * tile_n * 4          # output + accumulator scratch
                    + 256 * 1024)             # slack
        avail = int(vmem_limit * 0.85) - resident
        per_buffer = max(256 * 1024, min(per_buffer_target, avail // 2))
        max_ts = max(align_s, per_buffer // max(1, tile_n * H * g_itemsize))
        tile_s = _pick_seq_tile(S, align_s, max_ts)

    # Zero-pad the seq axis if tile_s does not divide S (exact: zeros add nothing to the seq-sum
    # and 1/S above uses the original S).  Avoids the old silent full-S fallback blowing VMEM.
    S_pad = _round_up(S, tile_s)
    if S_pad != S:
        grounded = jnp.pad(grounded, ((0, 0), (0, S_pad - S), (0, 0)))

    grid = (N // tile_n, S_pad // tile_s)

    kernel = functools.partial(_mc_head_kernel, use_gelu=("electra" in model_type))
    cost = pl.CostEstimate(
        flops=2 * N * H * H + 2 * N * S * H + 4 * N * H,
        transcendentals=N * H,
        bytes_accessed=(N * S * H * g_itemsize + N * H * 2 + H * H * 2 + 3 * H * 4 + N * 4),
    )

    logits = pl.pallas_call(
        kernel,
        out_shape=jax.ShapeDtypeStruct((N, 1), jnp.float32),
        grid_spec=pltpu.PrefetchScalarGridSpec(
            num_scalar_prefetch=0,
            grid=grid,
            in_specs=[
                pl.BlockSpec((tile_n, H), lambda n, s: (n, 0)),             # original CLS (bf16)
                pl.BlockSpec((tile_n, tile_s, H), lambda n, s: (n, s, 0)),  # grounded stream
                pl.BlockSpec((H, H), lambda n, s: (0, 0)),                  # pooler weight (bf16)
                pl.BlockSpec((1, H), lambda n, s: (0, 0)),                  # pooler bias (f32)
                pl.BlockSpec((H, 1), lambda n, s: (0, 0)),                  # classifier (orig half)
                pl.BlockSpec((H, 1), lambda n, s: (0, 0)),                  # classifier (grounded /S)
                pl.BlockSpec(memory_space=pltpu.MemorySpace.SMEM),          # classifier bias scalar
            ],
            out_specs=pl.BlockSpec((tile_n, 1), lambda n, s: (n, 0)),
            scratch_shapes=[pltpu.VMEM((tile_n, 1), jnp.float32)],
        ),
        compiler_params=pltpu.CompilerParams(
            dimension_semantics=("parallel", "arbitrary"),
            vmem_limit_bytes=int(vmem_limit),
        ),
        cost_estimate=cost,
    )(orig_cls_in, grounded, w_pool_in, b_pool_in, w_a, w_b, b_cls_in)
    return logits


def grounded_mc_forward(grounded_output, original_hidden, params, num_choice,
                        labels=None, model_type="roberta"):
    """Reproduces GroundedModelForMultiplceChoice.forward given the LM outputs.

    grounded_output : (real_bs*num_choice, S, H)
    original_hidden : (real_bs*num_choice, S, H)  == original_output[0]
    labels          : (real_bs,) int32 or None
    returns (loss, reshaped_logits) with reshaped_logits (real_bs, num_choice)
    """
    # CLS slice is tiny (N, H); done in the wrapper to keep all kernel blocks (8,128)-legal.
    orig_cls = original_hidden[:, 0, :]
    logits = mc_head_pallas(orig_cls, grounded_output,
                            params["w_pool"], params["b_pool"],
                            params["w_cls"], params["b_cls"],
                            model_type=model_type)                                # (N, 1)
    reshaped_logits = logits.reshape(-1, num_choice)                              # (real_bs, num_choice)

    loss = None
    if labels is not None:
        logp = jax.nn.log_softmax(reshaped_logits, axis=-1)
        loss = -jnp.mean(jnp.take_along_axis(logp, labels[:, None], axis=-1))
    return loss, reshaped_logits


def _reference_head(orig_cls, grounded, w_pool, b_pool, w_cls, b_cls, model_type="roberta"):
    """Pure-JAX reference matching the kernel's mixed precision (bf16 operands, f32 accum)."""
    x = orig_cls.astype(jnp.bfloat16).astype(jnp.float32)
    wp = jnp.asarray(w_pool, jnp.bfloat16).astype(jnp.float32)
    pooled = x @ wp + jnp.asarray(b_pool, jnp.float32).reshape(1, -1)
    pooled = jax.nn.gelu(pooled, approximate=False) if "electra" in model_type else jnp.tanh(pooled)
    gpool = jnp.mean(grounded.astype(jnp.float32), axis=1)
    cat = jnp.concatenate([pooled, gpool], axis=-1)
    return cat @ jnp.asarray(w_cls, jnp.float32).T + jnp.asarray(b_cls, jnp.float32).reshape(1, 1)


if __name__ == "__main__":
    real_bs, num_choice, seq, hidden = 4, 4, 16, 32
    N = real_bs * num_choice

    key = jax.random.PRNGKey(0)
    k1, k2, k3, k4, k5, k6, k7 = jax.random.split(key, 7)

    # TODO(synk): GroundedModel backbone (pretrained LM + adapter) is not defined in the snippet;
    #             synthesize its outputs deterministically (bf16, as recommended for streaming).
    grounded_output = jax.random.normal(k1, (N, seq, hidden), dtype=jnp.float32).astype(jnp.bfloat16)
    original_hidden = jax.random.normal(k2, (N, seq, hidden), dtype=jnp.float32).astype(jnp.bfloat16)

    # Deterministic parameter init (shapes per the module's __init__), kept in f32 master precision.
    params = {
        "w_pool": 0.05 * jax.random.normal(k3, (hidden, hidden), dtype=jnp.float32),
        "b_pool": 0.01 * jax.random.normal(k4, (1, hidden), dtype=jnp.float32),
        "w_cls": 0.05 * jax.random.normal(k5, (1, 2 * hidden), dtype=jnp.float32),
        "b_cls": 0.01 * jax.random.normal(k6, (1, 1), dtype=jnp.float32),
    }
    labels = jax.random.randint(k7, (real_bs,), 0, num_choice, dtype=jnp.int32)

    orig_cls = original_hidden[:, 0, :]

    # Force a non-trivial grid (2 N-tiles x 2 S-steps) so the streamed reduction is exercised.
    logits = mc_head_pallas(orig_cls, grounded_output,
                            params["w_pool"], params["b_pool"],
                            params["w_cls"], params["b_cls"],
                            model_type="roberta", tile_n=8, tile_s=8)
    logits = jax.block_until_ready(logits)

    # Auto-tiled (generation-aware) path through the full forward glue.
    loss, reshaped_logits = grounded_mc_forward(
        grounded_output, original_hidden, params, num_choice,
        labels=labels, model_type="roberta")
    loss = jax.block_until_ready(loss)
    reshaped_logits = jax.block_until_ready(reshaped_logits)

    # Cross-check against a pure-JAX reference of the same head.
    ref_logits = _reference_head(orig_cls, grounded_output,
                                 params["w_pool"], params["b_pool"],
                                 params["w_cls"], params["b_cls"]).reshape(real_bs, num_choice)
    assert reshaped_logits.shape == (real_bs, num_choice)
    assert jnp.allclose(logits.reshape(real_bs, num_choice), ref_logits, atol=2e-3, rtol=2e-3)
    assert jnp.allclose(reshaped_logits, ref_logits, atol=2e-3, rtol=2e-3)
    assert loss.shape == ()

    print("KERNEL_OK")
</pallas_src>

<mosaic_0001>
module attributes {stable_mosaic.version = 11 : i64} {
  func.func @_mc_head_kernel(%arg0: i32, %arg1: i32, %arg2: memref<8x32xbf16, #tpu.memory_space<vmem>>, %arg3: memref<8x8x32xbf16, #tpu.memory_space<vmem>>, %arg4: memref<32x32xbf16, #tpu.memory_space<vmem>>, %arg5: memref<1x32xf32, #tpu.memory_space<vmem>>, %arg6: memref<32x1xf32, #tpu.memory_space<vmem>>, %arg7: memref<32x1xf32, #tpu.memory_space<vmem>>, %arg8: memref<1x1xf32, #tpu.memory_space<smem>>, %arg9: memref<8x1xf32, #tpu.memory_space<vmem>>, %arg10: memref<8x1xf32, #tpu.memory_space<vmem>>) attributes {dimension_semantics = [#tpu.dimension_semantics<parallel>, #tpu.dimension_semantics<arbitrary>], iteration_bounds = array<i64: 2, 2>, scalar_prefetch = 0 : i64, scratch_operands = 1 : i64, tpu.core_type = #tpu.core_type<tc>, window_params = [{transform_indices = @transform_0, window_bounds = array<i64: 8, 32>}, {transform_indices = @transform_1, window_bounds = array<i64: 8, 8, 32>}, {pipeline_mode = #tpu.pipeline_mode<synchronous>, transform_indices = @transform_2, window_bounds = array<i64: 32, 32>}, {pipeline_mode = #tpu.pipeline_mode<synchronous>, transform_indices = @transform_3, window_bounds = array<i64: 1, 32>}, {pipeline_mode = #tpu.pipeline_mode<synchronous>, transform_indices = @transform_4, window_bounds = array<i64: 32, 1>}, {pipeline_mode = #tpu.pipeline_mode<synchronous>, transform_indices = @transform_5, window_bounds = array<i64: 32, 1>}, {transform_indices = @transform_6, window_bounds = array<i64: 1, 1>}, {transform_indices = @transform_7, window_bounds = array<i64: 8, 1>}]} {
    %c0_i32 = arith.constant 0 : i32
    %0 = arith.cmpi eq, %arg1, %c0_i32 : i32
    %1 = arith.extui %0 : i1 to i32
    %c0_i32_0 = arith.constant 0 : i32
    %2 = arith.cmpi ne, %1, %c0_i32_0 : i32
    scf.if %2 {
      %c0_11 = arith.constant 0 : index
      %c0_12 = arith.constant 0 : index
      %14 = vector.load %arg2[%c0_11, %c0_12] : memref<8x32xbf16, #tpu.memory_space<vmem>>, vector<8x32xbf16>
      %c0_13 = arith.constant 0 : index
      %c0_14 = arith.constant 0 : index
      %15 = vector.load %arg4[%c0_13, %c0_14] : memref<32x32xbf16, #tpu.memory_space<vmem>>, vector<32x32xbf16>
      %cst_15 = arith.constant dense<0.000000e+00> : vector<8x32xf32>
      %16 = tpu.matmul %14, %15, %cst_15 {dimension_numbers = #tpu.dot_dimension_numbers<[1], [0], [0], [1], [0, 0, 1, 1], [], []>} : vector<8x32xbf16>, vector<32x32xbf16>, vector<8x32xf32> -> vector<8x32xf32>
      %c0_16 = arith.constant 0 : index
      %c0_17 = arith.constant 0 : index
      %17 = vector.load %arg5[%c0_16, %c0_17] : memref<1x32xf32, #tpu.memory_space<vmem>>, vector<1x32xf32>
      %18 = vector.broadcast %17 : vector<1x32xf32> to vector<8x32xf32>
      %19 = arith.addf %16, %18 : vector<8x32xf32>
      %20 = math.tanh %19 : vector<8x32xf32>
      %c0_18 = arith.constant 0 : index
      %c0_19 = arith.constant 0 : index
      %21 = vector.load %arg6[%c0_18, %c0_19] : memref<32x1xf32, #tpu.memory_space<vmem>>, vector<32x1xf32>
      %cst_20 = arith.constant dense<0.000000e+00> : vector<8x1xf32>
      %22 = tpu.matmul %20, %21, %cst_20 {dimension_numbers = #tpu.dot_dimension_numbers<[1], [0], [0], [1], [0, 0, 1, 1], [], []>} : vector<8x32xf32>, vector<32x1xf32>, vector<8x1xf32> -> vector<8x1xf32>
      %c0_21 = arith.constant 0 : index
      %c0_22 = arith.constant 0 : index
      %23 = vector.load %arg10[%c0_21, %c0_22] : memref<8x1xf32, #tpu.memory_space<vmem>>, vector<8x1xf32>
      tpu.vector_store %arg10[%c0_21, %c0_22], %22 {strides = array<i32>} : memref<8x1xf32, #tpu.memory_space<vmem>>, vector<8x1xf32>,
    } else {
    }
    %c0 = arith.constant 0 : index
    %c0_1 = arith.constant 0 : index
    %c0_2 = arith.constant 0 : index
    %3 = vector.load %arg3[%c0, %c0_1, %c0_2] : memref<8x8x32xbf16, #tpu.memory_space<vmem>>, vector<8x8x32xbf16>
    %4 = arith.extf %3 : vector<8x8x32xbf16> to vector<8x8x32xf32>
    %cst = arith.constant dense<0.000000e+00> : vector<8x32xf32>
    %5 = vector.multi_reduction <add>, %4, %cst [1] : vector<8x8x32xf32> to vector<8x32xf32>
    %c0_3 = arith.constant 0 : index
    %c0_4 = arith.constant 0 : index
    %6 = vector.load %arg10[%c0_3, %c0_4] : memref<8x1xf32, #tpu.memory_space<vmem>>, vector<8x1xf32>
    %c0_5 = arith.constant 0 : index
    %c0_6 = arith.constant 0 : index
    %7 = vector.load %arg7[%c0_5, %c0_6] : memref<32x1xf32, #tpu.memory_space<vmem>>, vector<32x1xf32>
    %cst_7 = arith.constant dense<0.000000e+00> : vector<8x1xf32>
    %8 = tpu.matmul %5, %7, %cst_7 {dimension_numbers = #tpu.dot_dimension_numbers<[1], [0], [0], [1], [0, 0, 1, 1], [], []>} : vector<8x32xf32>, vector<32x1xf32>, vector<8x1xf32> -> vector<8x1xf32>
    %9 = arith.addf %6, %8 : vector<8x1xf32>
    %c0_8 = arith.constant 0 : index
    %c0_9 = arith.constant 0 : index
    %10 = vector.load %arg10[%c0_8, %c0_9] : memref<8x1xf32, #tpu.memory_space<vmem>>, vector<8x1xf32>
    tpu.vector_store %arg10[%c0_8, %c0_9], %9 {strides = array<i32>} : memref<8x1xf32, #tpu.memory_space<vmem>>, vector<8x1xf32>,
    %c1_i32 = arith.constant 1 : i32
    %11 = arith.cmpi eq, %arg1, %c1_i32 : i32
    %12 = arith.extui %11 : i1 to i32
    %c0_i32_10 = arith.constant 0 : i32
    %13 = arith.cmpi ne, %12, %c0_i32_10 : i32
    scf.if %13 {
      %c0_11 = arith.constant 0 : index
      %c0_12 = arith.constant 0 : index
      %14 = vector.load %arg10[%c0_11, %c0_12] : memref<8x1xf32, #tpu.memory_space<vmem>>, vector<8x1xf32>
      %c0_13 = arith.constant 0 : index
      %c0_14 = arith.constant 0 : index
      %15 = memref.load %arg8[%c0_13, %c0_14] : memref<1x1xf32, #tpu.memory_space<smem>>
      %16 = vector.broadcast %15 : f32 to vector<8x1xf32>
      %17 = arith.addf %14, %16 : vector<8x1xf32>
      %c0_15 = arith.constant 0 : index
      %c0_16 = arith.constant 0 : index
      %18 = vector.load %arg9[%c0_15, %c0_16] : memref<8x1xf32, #tpu.memory_space<vmem>>, vector<8x1xf32>
      tpu.vector_store %arg9[%c0_15, %c0_16], %17 {strides = array<i32>} : memref<8x1xf32, #tpu.memory_space<vmem>>, vector<8x1xf32>,
    } else {
    }
    return
  }
  func.func @transform_0(%arg0: i32, %arg1: i32) -> (i32, i32) {
    %c0_i32 = arith.constant 0 : i32
    %c0_i32_0 = arith.constant 0 : i32
    return %arg0, %c0_i32 : i32, i32
  }
  func.func @transform_1(%arg0: i32, %arg1: i32) -> (i32, i32, i32) {
    %c0_i32 = arith.constant 0 : i32
    %c0_i32_0 = arith.constant 0 : i32
    return %arg0, %arg1, %c0_i32 : i32, i32, i32
  }
  func.func @transform_2(%arg0: i32, %arg1: i32) -> (i32, i32) {
    %c0_i32 = arith.constant 0 : i32
    %c0_i32_0 = arith.constant 0 : i32
    %c0_i32_1 = arith.constant 0 : i32
    return %c0_i32, %c0_i32_0 : i32, i32
  }
  func.func @transform_3(%arg0: i32, %arg1: i32) -> (i32, i32) {
    %c0_i32 = arith.constant 0 : i32
    %c0_i32_0 = arith.constant 0 : i32
    %c0_i32_1 = arith.constant 0 : i32
    return %c0_i32, %c0_i32_0 : i32, i32
  }
  func.func @transform_4(%arg0: i32, %arg1: i32) -> (i32, i32) {
    %c0_i32 = arith.constant 0 : i32
    %c0_i32_0 = arith.constant 0 : i32
    %c0_i32_1 = arith.constant 0 : i32
    return %c0_i32, %c0_i32_0 : i32, i32
  }
  func.func @transform_5(%arg0: i32, %arg1: i32) -> (i32, i32) {
    %c0_i32 = arith.constant 0 : i32
    %c0_i32_0 = arith.constant 0 : i32
    %c0_i32_1 = arith.constant 0 : i32
    return %c0_i32, %c0_i32_0 : i32, i32
  }
  func.func @transform_6(%arg0: i32, %arg1: i32) -> (i32, i32) {
    %c0_i32 = arith.constant 0 : i32
    %c0_i32_0 = arith.constant 0 : i32
    %c0_i32_1 = arith.constant 0 : i32
    return %c0_i32, %c0_i32_0 : i32, i32
  }
  func.func @transform_7(%arg0: i32, %arg1: i32) -> (i32, i32) {
    %c0_i32 = arith.constant 0 : i32
    %c0_i32_0 = arith.constant 0 : i32
    return %arg0, %c0_i32 : i32, i32
  }
}

</mosaic_0001>

<llo_original>
// kernel: tpu_custom_call.1
$region0: #{tpu_custom_call.1}
  #allocation0 [shape = 'u32[]', space=smem, size = 0x4, offset = 0x4, fixed_abs, tag = 'smem constant byte address 0x4 - core index']
  #allocation1 [shape = 'u32[144,128]{1,0:T(1,128)}', space=vmem, size = 0x12000, scoped, tag = 'internal scratch']
  #allocation2 [shape = 'f32[8,1]{1,0:T(8,128)}', space=vmem, size = 0x1000, scoped, tag = 'scratch operand']
  #allocation3 [shape = 'f32[1,1]{1,0:T(1,128)S(6)}', space=smem, size = 0x200, scoped, tag = 'scoped memory for tpu_custom_call.1']
  %s0 = inlined_call_operand.vmem [shape: bf16[16,32], index: 0, kind: input, shape index: {}]
  %s1 = inlined_call_operand.hbm [shape: bf16[16,16,32], index: 1, kind: input, shape index: {}]
  %s2 = inlined_call_operand.vmem [shape: bf16[32,32], index: 2, kind: input, shape index: {}]
  %s3 = inlined_call_operand.vmem [shape: f32[1,32], index: 3, kind: input, shape index: {}]
  %s4 = inlined_call_operand.vmem [shape: f32[32,1], index: 4, kind: input, shape index: {}]
  %s5 = inlined_call_operand.vmem [shape: f32[32,1], index: 5, kind: input, shape index: {}]
  %s6 = inlined_call_operand.<no memory space> [shape: f32[1,1], index: 6, kind: input, shape index: {}]
  %s7 = inlined_call_operand.vmem [shape: f32[16,1], index: 7, kind: output, shape index: {}]
  %s8 = sld [smem:[#allocation0]]
  $region73: #{tpu_custom_call.1} parent=0
    _
  %s10 = ssub.s32 1, %s8
  %s11 = scalar_select 0, %s10, %s8
  %12 = sst [smem:[#allocation3]] %s6
  $region1: #{tpu_custom_call.1} parent=0
    #allocation4 [shape = 'u8[32768]{0}', space=vmem, size = 0x8000, scoped, tag = 'input window, operand 1']
    #allocation5 [shape = 's32[2]{0}', space=sflag, size = 0x8, scoped, tag = 'scoped memory for tpu_custom_call.1']
    %13 = vsyncpa [#allocation5], 0
    %s14 = scalar_lea.sflag [#allocation5], 1
    %15 = vsyncpa %s14, 0
    loop: start=0, step=1, limit=6
    $region2: #{tpu_custom_call.1} parent=1 // loop_pre_header
      _
    $region3: #{tpu_custom_call.1} parent=1 // loop_header
      %s17 = sphi 0, %s21
      %p18 = scmp.ge.s32.totalorder %s17, 6
      %s24 = sphi 0, %s36
      %s25 = sphi 0, %s32
      %s26 = sphi 0, %s24
      %s27 = sphi 0, %s25
      %s28 = sphi 0, %s26
      %s29 = sphi 0, %s27
      %s39 = sphi 0, %s41
      %s42 = sphi 0, %s39
      %s43 = sphi 0, %s42
      %s59 = sphi 0, %s43
      %s67 = sphi 0, %s69
      %s70 = sphi 0, %s67
      %s71 = sphi 0, %s70
      %s87 = sphi 0, %s71
      %s91 = sphi 0, %s91
      %s93 = sphi 0, %s91
      %s94 = sphi 0, %s93
      %s108 = sphi 0, %s94
      %s112 = sphi 0, %s112
      %s114 = sphi 0, %s112
      %s115 = sphi 0, %s114
      %s129 = sphi 0, %s115
      %s133 = sphi 0, %s133
      %s135 = sphi 0, %s133
      %s136 = sphi 0, %s135
      %s150 = sphi 0, %s136
      %s154 = sphi 0, %s154
      %s156 = sphi 0, %s154
      %s157 = sphi 0, %s156
      %s171 = sphi 0, %s157
      %s175 = sphi 0, %s175
      %s177 = sphi 0, %s175
      %s178 = sphi 0, %s177
      %s192 = sphi 0, %s178
      %s198 = sphi 0, %s200
      %s201 = sphi 0, %s198
      %s202 = sphi 0, %s201
      %s218 = sphi 0, %s202
    $region4: #{tpu_custom_call.1} parent=1 // loop_header_branch
      %20 = sbr.rel (%p18) target = $region8
    $region5: #{tpu_custom_call.1} parent=1 // loop_body
      %s22 = ssub.s32 %s17, 1
      %s23 = ssub.s32 %s17, 2
      %s30 = sadd.s32 1, %s25
      %p31 = scmp.ge.s32.totalorder %s30, 2
      %s32 = scalar_select %p31, 0, %s30
      %s33 = sadd.s32 1, %s24
      %s34 = scalar_select %p31, %s33, %s24
      %p35 = scmp.ge.s32.totalorder %s34, 2
      %s36 = scalar_select %p35, 0, %s34
      %s37 = ssub.s32 %s24, %s36
      %p38 = scmp.eq.s32.totalorder %s37, 0
      %s40 = sadd.s32 %s39, 1
      %s41 = scalar_select %p38, %s39, %s40
      %p44 = pneg %p38
      %p45 = scmp.eq.s32.totalorder %s17, 3
      %p46 = por %p44, %p45
      %p47 = scmp.ne.s32.totalorder %s39, %s42
      %p48 = scmp.eq.s32.totalorder %s17, 0
      %p49 = por %p47, %p48
      %p50 = scmp.ne.s32.totalorder %s39, %s42
      %p51 = scmp.eq.s32.totalorder %s22, 3
      %p52 = por %p50, %p51
      %p53 = scmp.ne.s32.totalorder %s42, %s43
      %p54 = scmp.eq.s32.totalorder %s22, 0
      %p55 = por %p53, %p54
      %p56 = scmp.ne.s32.totalorder %s42, %s43
      %p57 = scmp.eq.s32.totalorder %s23, 3
      %p58 = por %p56, %p57
      %p60 = scmp.ne.s32.totalorder %s43, %s59
      %p61 = scmp.eq.s32.totalorder %s23, 0
      %p62 = por %p60, %p61
      %s63 = ssub.s32 %s24, %s36
      %s64 = ssub.s32 %s25, %s32
      %s65 = sor.u32 %s63, %s64
      %p66 = scmp.eq.s32.totalorder %s65, 0
      %s68 = sadd.s32 %s67, 1
      %s69 = scalar_select %p66, %s67, %s68
      %p72 = pneg %p66
      %p73 = scmp.eq.s32.totalorder %s17, 3
      %p74 = por %p72, %p73
      %p75 = scmp.ne.s32.totalorder %s67, %s70
      %p76 = scmp.eq.s32.totalorder %s17, 0
      %p77 = por %p75, %p76
      %p78 = scmp.ne.s32.totalorder %s67, %s70
      %p79 = scmp.eq.s32.totalorder %s22, 3
      %p80 = por %p78, %p79
      %p81 = scmp.ne.s32.totalorder %s70, %s71
      %p82 = scmp.eq.s32.totalorder %s22, 0
      %p83 = por %p81, %p82
      %p84 = scmp.ne.s32.totalorder %s70, %s71
      %p85 = scmp.eq.s32.totalorder %s23, 3
      %p86 = por %p84, %p85
      %p88 = scmp.ne.s32.totalorder %s71, %s87
      %p89 = scmp.eq.s32.totalorder %s23, 0
      %p90 = por %p88, %p89
      %s92 = sadd.s32 %s91, 1
      %p95 = scmp.eq.s32.totalorder %s17, 3
      %p96 = scmp.ne.s32.totalorder %s91, %s93
      %p97 = scmp.eq.s32.totalorder %s17, 0
      %p98 = por %p96, %p97
      %p99 = scmp.ne.s32.totalorder %s91, %s93
      %p100 = scmp.eq.s32.totalorder %s22, 3
      %p101 = por %p99, %p100
      %p102 = scmp.ne.s32.totalorder %s93, %s94
      %p103 = scmp.eq.s32.totalorder %s22, 0
      %p104 = por %p102, %p103
      %p105 = scmp.ne.s32.totalorder %s93, %s94
      %p106 = scmp.eq.s32.totalorder %s23, 3
      %p107 = por %p105, %p106
      %p109 = scmp.ne.s32.totalorder %s94, %s108
      %p110 = scmp.eq.s32.totalorder %s23, 0
      %p111 = por %p109, %p110
      %s113 = sadd.s32 %s112, 1
      %p116 = scmp.eq.s32.totalorder %s17, 3
      %p117 = scmp.ne.s32.totalorder %s112, %s114
      %p118 = scmp.eq.s32.totalorder %s17, 0
      %p119 = por %p117, %p118
      %p120 = scmp.ne.s32.totalorder %s112, %s114
      %p121 = scmp.eq.s32.totalorder %s22, 3
      %p122 = por %p120, %p121
      %p123 = scmp.ne.s32.totalorder %s114, %s115
      %p124 = scmp.eq.s32.totalorder %s22, 0
      %p125 = por %p123, %p124
      %p126 = scmp.ne.s32.totalorder %s114, %s115
      %p127 = scmp.eq.s32.totalorder %s23, 3
      %p128 = por %p126, %p127
      %p130 = scmp.ne.s32.totalorder %s115, %s129
      %p131 = scmp.eq.s32.totalorder %s23, 0
      %p132 = por %p130, %p131
      %s134 = sadd.s32 %s133, 1
      %p137 = scmp.eq.s32.totalorder %s17, 3
      %p138 = scmp.ne.s32.totalorder %s133, %s135
      %p139 = scmp.eq.s32.totalorder %s17, 0
      %p140 = por %p138, %p139
      %p141 = scmp.ne.s32.totalorder %s133, %s135
      %p142 = scmp.eq.s32.totalorder %s22, 3
      %p143 = por %p141, %p142
      %p144 = scmp.ne.s32.totalorder %s135, %s136
      %p145 = scmp.eq.s32.totalorder %s22, 0
      %p146 = por %p144, %p145
      %p147 = scmp.ne.s32.totalorder %s135, %s136
      %p148 = scmp.eq.s32.totalorder %s23, 3
      %p149 = por %p147, %p148
      %p151 = scmp.ne.s32.totalorder %s136, %s150
      %p152 = scmp.eq.s32.totalorder %s23, 0
      %p153 = por %p151, %p152
      %s155 = sadd.s32 %s154, 1
      %p158 = scmp.eq.s32.totalorder %s17, 3
      %p159 = scmp.ne.s32.totalorder %s154, %s156
      %p160 = scmp.eq.s32.totalorder %s17, 0
      %p161 = por %p159, %p160
      %p162 = scmp.ne.s32.totalorder %s154, %s156
      %p163 = scmp.eq.s32.totalorder %s22, 3
      %p164 = por %p162, %p163
      %p165 = scmp.ne.s32.totalorder %s156, %s157
      %p166 = scmp.eq.s32.totalorder %s22, 0
      %p167 = por %p165, %p166
      %p168 = scmp.ne.s32.totalorder %s156, %s157
      %p169 = scmp.eq.s32.totalorder %s23, 3
      %p170 = por %p168, %p169
      %p172 = scmp.ne.s32.totalorder %s157, %s171
      %p173 = scmp.eq.s32.totalorder %s23, 0
      %p174 = por %p172, %p173
      %s176 = sadd.s32 %s175, 1
      %p179 = scmp.eq.s32.totalorder %s17, 3
      %p180 = scmp.ne.s32.totalorder %s175, %s177
      %p181 = scmp.eq.s32.totalorder %s17, 0
      %p182 = por %p180, %p181
      %p183 = scmp.ne.s32.totalorder %s175, %s177
      %p184 = scmp.eq.s32.totalorder %s22, 3
      %p185 = por %p183, %p184
      %p186 = scmp.ne.s32.totalorder %s177, %s178
      %p187 = scmp.eq.s32.totalorder %s22, 0
      %p188 = por %p186, %p187
      %p189 = scmp.ne.s32.totalorder %s177, %s178
      %p190 = scmp.eq.s32.totalorder %s23, 3
      %p191 = por %p189, %p190
      %p193 = scmp.ne.s32.totalorder %s178, %s192
      %p194 = scmp.eq.s32.totalorder %s23, 0
      %p195 = por %p193, %p194
      %s196 = ssub.s32 %s24, %s36
      %p197 = scmp.eq.s32.totalorder %s196, 0
      %s199 = sadd.s32 %s198, 1
      %s200 = scalar_select %p197, %s198, %s199
      %p203 = pneg %p197
      %p204 = scmp.eq.s32.totalorder %s17, 3
      %p205 = por %p203, %p204
      %p206 = scmp.ne.s32.totalorder %s198, %s201
      %p207 = scmp.eq.s32.totalorder %s17, 0
      %p208 = por %p206, %p207
      %p209 = scmp.ne.s32.totalorder %s198, %s201
      %p210 = scmp.eq.s32.totalorder %s22, 3
      %p211 = por %p209, %p210
      %p212 = scmp.ne.s32.totalorder %s201, %s202
      %p213 = scmp.eq.s32.totalorder %s22, 0
      %p214 = por %p212, %p213
      %p215 = scmp.ne.s32.totalorder %s201, %s202
      %p216 = scmp.eq.s32.totalorder %s23, 3
      %p217 = por %p215, %p216
      %p219 = scmp.ne.s32.totalorder %s202, %s218
      %p220 = scmp.eq.s32.totalorder %s23, 0
      %p221 = por %p219, %p220
      %p222 = scmp.le.s32.totalorder 1, %s17
      %p223 = scmp.lt.s32.totalorder %s17, 5
      %p224 = pnand %p222, %p223
      %p225 = pneg %p224
      // Predicated region
      $region9: #{tpu_custom_call.1} parent=5 // pred_check
        _
      $region10: #{tpu_custom_call.1} parent=5 // pred_check_branch
        %227 = sbr.rel (%p224) target = $region12
      $region11: #{tpu_custom_call.1} parent=5 // pred_region
        %s228 = ssub.s32 %s17, 1
        // Predicated region
        $region13: #{tpu_custom_call.1} parent=11 // pred_check
          %p229 = pneg %p104
        $region14: #{tpu_custom_call.1} parent=11 // pred_check_branch
          %231 = sbr.rel (%p229) target = $region16
        $region15: #{tpu_custom_call.1} parent=11 // pred_region
          _
        $region16: #{tpu_custom_call.1} parent=11 // pred_fallthru
          _
        // Predicated region
        $region17: #{tpu_custom_call.1} parent=11 // pred_check
          %p232 = pneg %p125
        $region18: #{tpu_custom_call.1} parent=11 // pred_check_branch
          %234 = sbr.rel (%p232) target = $region20
        $region19: #{tpu_custom_call.1} parent=11 // pred_region
          _
        $region20: #{tpu_custom_call.1} parent=11 // pred_fallthru
          _
        // Predicated region
        $region21: #{tpu_custom_call.1} parent=11 // pred_check
          %p235 = pneg %p146
        $region22: #{tpu_custom_call.1} parent=11 // pred_check_branch
          %237 = sbr.rel (%p235) target = $region24
        $region23: #{tpu_custom_call.1} parent=11 // pred_region
          _
        $region24: #{tpu_custom_call.1} parent=11 // pred_fallthru
          _
        // Predicated region
        $region25: #{tpu_custom_call.1} parent=11 // pred_check
          %p238 = pneg %p167
        $region26: #{tpu_custom_call.1} parent=11 // pred_check_branch
          %240 = sbr.rel (%p238) target = $region28
        $region27: #{tpu_custom_call.1} parent=11 // pred_region
          _
        $region28: #{tpu_custom_call.1} parent=11 // pred_fallthru
          _
        // Predicated region
        $region29: #{tpu_custom_call.1} parent=11 // pred_check
          %p241 = pneg %p188
        $region30: #{tpu_custom_call.1} parent=11 // pred_check_branch
          %243 = sbr.rel (%p241) target = $region32
        $region31: #{tpu_custom_call.1} parent=11 // pred_region
          _
        $region32: #{tpu_custom_call.1} parent=11 // pred_fallthru
          _
      $region12: #{tpu_custom_call.1} parent=5 // pred_fallthru
        _
      %p244 = scmp.lt.s32.totalorder %s17, 4
      // Predicated region
      $region33: #{tpu_custom_call.1} parent=5 // pred_check
        %p245 = pneg %p244
      $region34: #{tpu_custom_call.1} parent=5 // pred_check_branch
        %247 = sbr.rel (%p245) target = $region36
      $region35: #{tpu_custom_call.1} parent=5 // pred_region
        // Predicated region
        $region37: #{tpu_custom_call.1} parent=35 // pred_check
          %p248 = pneg %p49
        $region38: #{tpu_custom_call.1} parent=35 // pred_check_branch
          %250 = sbr.rel (%p248) target = $region40
        $region39: #{tpu_custom_call.1} parent=35 // pred_region
          %p251 = scmp.lt.s32.totalorder %s24, 1
          %s252 = scalar_select %p251, %s24, 1
          %s253 = smul.addr %s252, 4
          %s254 = scalar_lea.vmem %s0, %s253
        $region40: #{tpu_custom_call.1} parent=35 // pred_fallthru
          _
        // Predicated region
        $region41: #{tpu_custom_call.1} parent=35 // pred_check
          %p255 = pneg %p77
        $region42: #{tpu_custom_call.1} parent=35 // pred_check_branch
          %257 = sbr.rel (%p255) target = $region44
        $region43: #{tpu_custom_call.1} parent=35 // pred_region
          %s258 = sand.u32 %s67, 1
          %s259 = scalar_lea.sflag [#allocation5], %s258
          %s260 = sand.u32 %s67, 1
          %s261 = smul.addr %s260, 32
          %s262 = scalar_lea.vmem [#allocation4], %s261
          %s263 = smul.u32 8, %s24
          %s265 = ssub.s32 512, 512
          %266 = vsyncadd %s259, %s265
          %s267 = smul.addr %s263, 2
          %s268 = sadd.s32 %s25, %s267
          %s269 = smul.addr %s268, 64
          %s270 = scalar_lea.hbm %s1, %s269
          %s271 = sshll.u32 %s262, 4
          %s272 = int_to_ptr.vmem [resolvable:$true] %s271
          %277 = dma.hbm_to_vmem [thread:$0]  %s270, 512, %s272, %s259, 128, 64, 4
        $region44: #{tpu_custom_call.1} parent=35 // pred_fallthru
          _
      $region36: #{tpu_custom_call.1} parent=5 // pred_fallthru
        _
      %p278 = scmp.le.s32.totalorder 1, %s17
      %p279 = scmp.lt.s32.totalorder %s17, 5
      %p280 = pnand %p278, %p279
      %p281 = pneg %p280
      // Predicated region
      $region45: #{tpu_custom_call.1} parent=5 // pred_check
        _
      $region46: #{tpu_custom_call.1} parent=5 // pred_check_branch
        %283 = sbr.rel (%p280) target = $region48
      $region47: #{tpu_custom_call.1} parent=5 // pred_region
        %s284 = ssub.s32 %s17, 1
        %s285 = sand.u32 %s70, 1
        %s286 = scalar_lea.sflag [#allocation5], %s285
        %s287 = sand.u32 %s70, 1
        %s288 = smul.addr %s287, 32
        %s289 = scalar_lea.vmem [#allocation4], %s288
        // Predicated region
        $region49: #{tpu_custom_call.1} parent=47 // pred_check
          %p290 = pneg %p83
        $region50: #{tpu_custom_call.1} parent=47 // pred_check_branch
          %292 = sbr.rel (%p290) target = $region52
        $region51: #{tpu_custom_call.1} parent=47 // pred_region
          %293 = dma.done %s286, 512
        $region52: #{tpu_custom_call.1} parent=47 // pred_fallthru
          _
        %p294 = scmp.lt.s32.totalorder %s26, 1
        %s295 = scalar_select %p294, %s26, 1
        %s296 = smul.addr %s295, 4
        %s297 = scalar_lea.vmem %s0, %s296
        %p298 = pneg %p55
        %p299 = pneg %p52
        %s300 = sand.u32 %s70, 1
        %s301 = scalar_lea.sflag [#allocation5], %s300
        %s302 = sand.u32 %s70, 1
        %s303 = smul.addr %s302, 32
        %s304 = scalar_lea.vmem [#allocation4], %s303
        %p305 = pneg %p83
        %p306 = pneg %p80
        %p307 = pneg %p104
        %p308 = pneg %p101
        %p309 = pneg %p125
        %p310 = pneg %p122
        %p311 = pneg %p146
        %p312 = pneg %p143
        %p313 = pneg %p167
        %p314 = pneg %p164
        %p315 = pneg %p188
        %p316 = pneg %p185
        %p317 = pneg %p214
        %p318 = pneg %p211
        %p319 = scmp.lt.s32.totalorder %s26, 1
        %s320 = scalar_select %p319, %s26, 1
        %s321 = smul.addr %s320, 8
        %s322 = scalar_lea.vmem %s7, %s321
        %p323 = scmp.lt.s32.totalorder %s26, 1
        %s324 = scalar_select %p323, %s26, 1
        %s325 = smul.addr %s324, 4
        %s326 = scalar_lea.vmem %s0, %s325
        %s327 = smul.u32 8, %s26
        %p328 = scmp.lt.s32.totalorder %s26, 1
        %s329 = scalar_select %p328, %s26, 1
        %s330 = smul.addr %s329, 8
        %s331 = scalar_lea.vmem %s7, %s330
        %p333 = scmp.eq.s32.totalorder %s27, 0
        // Predicated region
        $region53: #{tpu_custom_call.1} parent=47 // pred_check
          %p334 = pneg %p333
        $region54: #{tpu_custom_call.1} parent=47 // pred_check_branch
          %336 = sbr.rel (%p334) target = $region56
        $region55: #{tpu_custom_call.1} parent=47 // pred_region
          %v337 = vld [vmem:[%s326] sm:$0xf]
          %v338 = vld [vmem:[%s2] sm:$0xf]
          %v339 = vld [vmem:[%s2 + $0x4] sm:$0xf]
          %v340 = vld [vmem:[%s2 + $0x8] sm:$0xf]
          %v341 = vld [vmem:[%s2 + $0xc] sm:$0xf]
          %v342 = vld [vmem:[%s3] sm:$0x1]
          %v344 = vlaneseq
          %v345 = vshrl.u32 %v344, 7
          %v346 = vsub.s32 0, %v345
          %v347 = vrot.slane %v342, %v346
          %v353 = vunpack.c.l.b16 %v338
          %v354 = vunpack.c.l.b16 %v339
          %v355 = vunpack.c.l.b16 %v340
          %v356 = vunpack.c.l.b16 %v341
          %v357 = vpack.c.b16 %v354, %v353
          %v358 = vpack.c.b16 %v356, %v355
          %vm361 = vcmask 261120
          %v363 = vsel %vm361, %v337, 0
          %365 = vmatprep.subr.bf16.mxu0 0
          %366 = vmatpush1.bf16.msra.mxu0 0
          %367 = vmatprep.subr.bf16.mxu0 0
          %368 = vmatpush1.bf16.msra.mxu0 0
          %369 = vmatprep.subr.bf16.mxu0 0
          %370 = vmatpush1.bf16.msra.mxu0 0
          %371 = vmatprep.subr.bf16.mxu0 0
          %372 = vmatpush1.bf16.msra.mxu0 0
          %373 = vmatprep.subr.bf16.mxu0 0
          %374 = vmatpush1.bf16.msra.mxu0 0
          %375 = vmatprep.subr.bf16.mxu0 0
          %376 = vmatpush1.bf16.msra.mxu0 0
          %377 = vmatprep.subr.bf16.mxu0 0
          %378 = vmatpush1.bf16.msra.mxu0 %v358
          %379 = vmatprep.subr.bf16.mxu0 0
          %380 = vmatpush1.bf16.msra.mxu0 %v357
          %381 = vmatprep.subr.bf16.mxu0 0
          %382 = vmatpush2.bf16.msra.mxu0 0
          %383 = vmatprep.subr.bf16.mxu0 0
          %384 = vmatpush2.bf16.msra.mxu0 0
          %385 = vmatprep.subr.bf16.mxu0 0
          %386 = vmatpush2.bf16.msra.mxu0 0
          %387 = vmatprep.subr.bf16.mxu0 0
          %388 = vmatpush2.bf16.msra.mxu0 0
          %389 = vmatprep.subr.bf16.mxu0 0
          %390 = vmatpush2.bf16.msra.mxu0 0
          %391 = vmatprep.subr.bf16.mxu0 0
          %392 = vmatpush2.bf16.msra.mxu0 0
          %393 = vmatprep.subr.bf16.mxu0 0
          %394 = vmatpush2.bf16.msra.mxu0 0
          %395 = vmatprep.subr.bf16.mxu0 0
          %396 = vmatpush2.bf16.msra.mxu0 0
          %397 = vmatprep.mubr.bf16.mxu0 0
          %398 = vmatmul.mubr.bf16.gmra.mxu0 %v363
          %v399 = vpop.f32.mrf.mxu0
          %v400 = vadd.f32 %v347, %v399
          %v401 = vpop.f32.mrf.mxu0
          %v402 = vpop.f32.mrf.mxu0
          %v403 = vpop.f32.mrf.mxu0
          %404 = vdwg.mxu0
          %v405 = vtanh.pop %v400
          %v406 = vld [vmem:[%s4] sm:$0xff]
          %v407 = vld [vmem:[%s4 + $0x8] sm:$0xff]
          %v408 = vld [vmem:[%s4 + $0x10] sm:$0xff]
          %v409 = vld [vmem:[%s4 + $0x18] sm:$0xff]
          %v411 = vsel %vm361, %v405, 0
          %413 = vmatprep.subr.mxu0 0.0
          %414 = vmatpush1.msra.mxu0 0.0
          %415 = vmatprep.subr.mxu0 0.0
          %416 = vmatpush1.msra.mxu0 0.0
          %417 = vmatprep.subr.mxu0 0.0
          %418 = vmatpush1.msra.mxu0 0.0
          %419 = vmatprep.subr.mxu0 0.0
          %420 = vmatpush1.msra.mxu0 0.0
          %421 = vmatprep.subr.mxu0 0.0
          %422 = vmatpush1.msra.mxu0 0.0
          %423 = vmatprep.subr.mxu0 0.0
          %424 = vmatpush1.msra.mxu0 0.0
          %425 = vmatprep.subr.mxu0 0.0
          %426 = vmatpush1.msra.mxu0 0.0
          %427 = vmatprep.subr.mxu0 0.0
          %428 = vmatpush1.msra.mxu0 0.0
          %429 = vmatprep.subr.mxu0 0.0
          %430 = vmatpush1.msra.mxu0 0.0
          %431 = vmatprep.subr.mxu0 0.0
          %432 = vmatpush1.msra.mxu0 0.0
          %433 = vmatprep.subr.mxu0 0.0
          %434 = vmatpush1.msra.mxu0 0.0
          %435 = vmatprep.subr.mxu0 0.0
          %436 = vmatpush1.msra.mxu0 0.0
          %437 = vmatprep.subr.mxu0 0.0
          %438 = vmatpush1.msra.mxu0 %v409
          %439 = vmatprep.subr.mxu0 0.0
          %440 = vmatpush1.msra.mxu0 %v408
          %441 = vmatprep.subr.mxu0 0.0
          %442 = vmatpush1.msra.mxu0 %v407
          %443 = vmatprep.subr.mxu0 0.0
          %444 = vmatpush1.msra.mxu0 %v406
          %445 = vmatprep.subr.mxu0 0.0
          %446 = vmatpush2.msra.mxu0 0.0
          %447 = vmatprep.subr.mxu0 0.0
          %448 = vmatpush2.msra.mxu0 0.0
          %449 = vmatprep.subr.mxu0 0.0
          %450 = vmatpush2.msra.mxu0 0.0
          %451 = vmatprep.subr.mxu0 0.0
          %452 = vmatpush2.msra.mxu0 0.0
          %453 = vmatprep.subr.mxu0 0.0
          %454 = vmatpush2.msra.mxu0 0.0
          %455 = vmatprep.subr.mxu0 0.0
          %456 = vmatpush2.msra.mxu0 0.0
          %457 = vmatprep.subr.mxu0 0.0
          %458 = vmatpush2.msra.mxu0 0.0
          %459 = vmatprep.subr.mxu0 0.0
          %460 = vmatpush2.msra.mxu0 0.0
          %461 = vmatprep.subr.mxu0 0.0
          %462 = vmatpush2.msra.mxu0 0.0
          %463 = vmatprep.subr.mxu0 0.0
          %464 = vmatpush2.msra.mxu0 0.0
          %465 = vmatprep.subr.mxu0 0.0
          %466 = vmatpush2.msra.mxu0 0.0
          %467 = vmatprep.subr.mxu0 0.0
          %468 = vmatpush2.msra.mxu0 0.0
          %469 = vmatprep.subr.mxu0 0.0
          %470 = vmatpush2.msra.mxu0 0.0
          %471 = vmatprep.subr.mxu0 0.0
          %472 = vmatpush2.msra.mxu0 0.0
          %473 = vmatprep.subr.mxu0 0.0
          %474 = vmatpush2.msra.mxu0 0.0
          %475 = vmatprep.subr.mxu0 0.0
          %476 = vmatpush2.msra.mxu0 0.0
          %477 = vmatprep.mubr.f32.mxu0 0.0
          %478 = vmatmul.mubr.f32.gmra.mxu0 %v411
          %v479 = vpop.f32.mrf.mxu0
          %v480 = vadd.f32 0.0, %v479
          %v481 = vpop.f32.mrf.mxu0
          %482 = vdwg.mxu0
          %vm483 = vcmask 7168
          %484 = vst.msk [vmem:[#allocation2] sm:$0xff] %vm483, %v480
        $region56: #{tpu_custom_call.1} parent=47 // pred_fallthru
          _
        %v485 = vld [vmem:[%s289] sm:$0xf]
        %v486 = vld [vmem:[%s289 + $0x4] sm:$0xf]
        %v487 = vld [vmem:[%s289 + $0x8] sm:$0xf]
        %v488 = vld [vmem:[%s289 + $0xc] sm:$0xf]
        %v489 = vld [vmem:[%s289 + $0x10] sm:$0xf]
        %v490 = vld [vmem:[%s289 + $0x14] sm:$0xf]
        %v491 = vld [vmem:[%s289 + $0x18] sm:$0xf]
        %v492 = vld [vmem:[%s289 + $0x1c] sm:$0xf]
        %v493 = vunpack.c.l.bf16 %v485
        %v494 = vunpack.c.l.bf16 %v486
        %v495 = vunpack.c.l.bf16 %v487
        %v496 = vunpack.c.l.bf16 %v488
        %v497 = vunpack.c.l.bf16 %v489
        %v498 = vunpack.c.l.bf16 %v490
        %v499 = vunpack.c.l.bf16 %v491
        %v500 = vunpack.c.l.bf16 %v492
        %vm501 = vcmask 261120
        %v502 = vsel %vm501, %v493, 0.0
        %v503 = vrot.slane %v502, 4
        %v504 = vadd.f32 %v502, %v503
        %v505 = vrot.slane %v504, 2
        %v506 = vadd.f32 %v504, %v505
        %v507 = vrot.slane %v506, 1
        %v508 = vadd.f32 %v506, %v507
        %v509 = vsel %vm501, %v494, 0.0
        %v510 = vrot.slane %v509, 4
        %v511 = vadd.f32 %v509, %v510
        %v512 = vrot.slane %v511, 2
        %v513 = vadd.f32 %v511, %v512
        %v514 = vrot.slane %v513, 1
        %v515 = vadd.f32 %v513, %v514
        %v516 = vsel %vm501, %v495, 0.0
        %v517 = vrot.slane %v516, 4
        %v518 = vadd.f32 %v516, %v517
        %v519 = vrot.slane %v518, 2
        %v520 = vadd.f32 %v518, %v519
        %v521 = vrot.slane %v520, 1
        %v522 = vadd.f32 %v520, %v521
        %v523 = vsel %vm501, %v496, 0.0
        %v524 = vrot.slane %v523, 4
        %v525 = vadd.f32 %v523, %v524
        %v526 = vrot.slane %v525, 2
        %v527 = vadd.f32 %v525, %v526
        %v528 = vrot.slane %v527, 1
        %v529 = vadd.f32 %v527, %v528
        %v530 = vsel %vm501, %v497, 0.0
        %v531 = vrot.slane %v530, 4
        %v532 = vadd.f32 %v530, %v531
        %v533 = vrot.slane %v532, 2
        %v534 = vadd.f32 %v532, %v533
        %v535 = vrot.slane %v534, 1
        %v536 = vadd.f32 %v534, %v535
        %v537 = vsel %vm501, %v498, 0.0
        %v538 = vrot.slane %v537, 4
        %v539 = vadd.f32 %v537, %v538
        %v540 = vrot.slane %v539, 2
        %v541 = vadd.f32 %v539, %v540
        %v542 = vrot.slane %v541, 1
        %v543 = vadd.f32 %v541, %v542
        %v544 = vsel %vm501, %v499, 0.0
        %v545 = vrot.slane %v544, 4
        %v546 = vadd.f32 %v544, %v545
        %v547 = vrot.slane %v546, 2
        %v548 = vadd.f32 %v546, %v547
        %v549 = vrot.slane %v548, 1
        %v550 = vadd.f32 %v548, %v549
        %v551 = vsel %vm501, %v500, 0.0
        %v552 = vrot.slane %v551, 4
        %v553 = vadd.f32 %v551, %v552
        %v554 = vrot.slane %v553, 2
        %v555 = vadd.f32 %v553, %v554
        %v556 = vrot.slane %v555, 1
        %v557 = vadd.f32 %v555, %v556
        %v558 = vld [vmem:[#allocation2] sm:$0xff]
        %v559 = vld [vmem:[%s5] sm:$0xff]
        %v560 = vld [vmem:[%s5 + $0x8] sm:$0xff]
        %v561 = vld [vmem:[%s5 + $0x10] sm:$0xff]
        %v562 = vld [vmem:[%s5 + $0x18] sm:$0xff]
        %vm571 = vcmask 1041409
        %v572 = vsel %vm571, %v515, %v508
        %vm573 = vcmask 1042434
        %v574 = vsel %vm573, %v522, %v572
        %vm575 = vcmask 1043459
        %v576 = vsel %vm575, %v529, %v574
        %vm577 = vcmask 1044484
        %v578 = vsel %vm577, %v536, %v576
        %vm579 = vcmask 1045509
        %v580 = vsel %vm579, %v543, %v578
        %vm581 = vcmask 1046534
        %v582 = vsel %vm581, %v550, %v580
        %vm583 = vcmask 1047559
        %v584 = vsel %vm583, %v557, %v582
        %v585 = vsel %vm501, %v584, 0
        %587 = vmatprep.subr.mxu0 0.0
        %588 = vmatpush1.msra.mxu0 0.0
        %589 = vmatprep.subr.mxu0 0.0
        %590 = vmatpush1.msra.mxu0 0.0
        %591 = vmatprep.subr.mxu0 0.0
        %592 = vmatpush1.msra.mxu0 0.0
        %593 = vmatprep.subr.mxu0 0.0
        %594 = vmatpush1.msra.mxu0 0.0
        %595 = vmatprep.subr.mxu0 0.0
        %596 = vmatpush1.msra.mxu0 0.0
        %597 = vmatprep.subr.mxu0 0.0
        %598 = vmatpush1.msra.mxu0 0.0
        %599 = vmatprep.subr.mxu0 0.0
        %600 = vmatpush1.msra.mxu0 0.0
        %601 = vmatprep.subr.mxu0 0.0
        %602 = vmatpush1.msra.mxu0 0.0
        %603 = vmatprep.subr.mxu0 0.0
        %604 = vmatpush1.msra.mxu0 0.0
        %605 = vmatprep.subr.mxu0 0.0
        %606 = vmatpush1.msra.mxu0 0.0
        %607 = vmatprep.subr.mxu0 0.0
        %608 = vmatpush1.msra.mxu0 0.0
        %609 = vmatprep.subr.mxu0 0.0
        %610 = vmatpush1.msra.mxu0 0.0
        %611 = vmatprep.subr.mxu0 0.0
        %612 = vmatpush1.msra.mxu0 %v562
        %613 = vmatprep.subr.mxu0 0.0
        %614 = vmatpush1.msra.mxu0 %v561
        %615 = vmatprep.subr.mxu0 0.0
        %616 = vmatpush1.msra.mxu0 %v560
        %617 = vmatprep.subr.mxu0 0.0
        %618 = vmatpush1.msra.mxu0 %v559
        %619 = vmatprep.subr.mxu0 0.0
        %620 = vmatpush2.msra.mxu0 0.0
        %621 = vmatprep.subr.mxu0 0.0
        %622 = vmatpush2.msra.mxu0 0.0
        %623 = vmatprep.subr.mxu0 0.0
        %624 = vmatpush2.msra.mxu0 0.0
        %625 = vmatprep.subr.mxu0 0.0
        %626 = vmatpush2.msra.mxu0 0.0
        %627 = vmatprep.subr.mxu0 0.0
        %628 = vmatpush2.msra.mxu0 0.0
        %629 = vmatprep.subr.mxu0 0.0
        %630 = vmatpush2.msra.mxu0 0.0
        %631 = vmatprep.subr.mxu0 0.0
        %632 = vmatpush2.msra.mxu0 0.0
        %633 = vmatprep.subr.mxu0 0.0
        %634 = vmatpush2.msra.mxu0 0.0
        %635 = vmatprep.subr.mxu0 0.0
        %636 = vmatpush2.msra.mxu0 0.0
        %637 = vmatprep.subr.mxu0 0.0
        %638 = vmatpush2.msra.mxu0 0.0
        %639 = vmatprep.subr.mxu0 0.0
        %640 = vmatpush2.msra.mxu0 0.0
        %641 = vmatprep.subr.mxu0 0.0
        %642 = vmatpush2.msra.mxu0 0.0
        %643 = vmatprep.subr.mxu0 0.0
        %644 = vmatpush2.msra.mxu0 0.0
        %645 = vmatprep.subr.mxu0 0.0
        %646 = vmatpush2.msra.mxu0 0.0
        %647 = vmatprep.subr.mxu0 0.0
        %648 = vmatpush2.msra.mxu0 0.0
        %649 = vmatprep.subr.mxu0 0.0
        %650 = vmatpush2.msra.mxu0 0.0
        %651 = vmatprep.mubr.f32.mxu0 0.0
        %652 = vmatmul.mubr.f32.gmra.mxu0 %v585
        %v653 = vpop.f32.mrf.mxu0
        %v654 = vadd.f32 0.0, %v653
        %v655 = vpop.f32.mrf.mxu0
        %656 = vdwg.mxu0
        %v657 = vadd.f32 %v558, %v654
        %vm658 = vcmask 7168
        %659 = vst.msk [vmem:[#allocation2] sm:$0xff] %vm658, %v657
        %p660 = scmp.eq.s32.totalorder %s27, 1
        // Predicated region
        $region57: #{tpu_custom_call.1} parent=47 // pred_check
          %p661 = pneg %p660
        $region58: #{tpu_custom_call.1} parent=47 // pred_check_branch
          %663 = sbr.rel (%p661) target = $region60
        $region59: #{tpu_custom_call.1} parent=47 // pred_region
          %v664 = vld [vmem:[#allocation2] sm:$0xff]
          %s665 = sld [smem:[#allocation3]]
          %v666 = vstv %s665
          %v667 = vadd.f32 %v664, %v666
          %668 = vst.msk [vmem:[%s331] sm:$0xff] %vm658, %v667
        $region60: #{tpu_custom_call.1} parent=47 // pred_fallthru
          _
        %p669 = scmp.lt.s32.totalorder %s26, 1
        %s670 = scalar_select %p669, %s26, 1
        %s671 = smul.addr %s670, 8
        %s672 = scalar_lea.vmem %s7, %s671
        // Predicated region
        $region61: #{tpu_custom_call.1} parent=47 // pred_check
          %p673 = pneg %p211
        $region62: #{tpu_custom_call.1} parent=47 // pred_check_branch
          %675 = sbr.rel (%p673) target = $region64
        $region63: #{tpu_custom_call.1} parent=47 // pred_region
          _
        $region64: #{tpu_custom_call.1} parent=47 // pred_fallthru
          _
      $region48: #{tpu_custom_call.1} parent=5 // pred_fallthru
        _
      %p676 = scmp.le.s32.totalorder 2, %s17
      // Predicated region
      $region65: #{tpu_custom_call.1} parent=5 // pred_check
        %p677 = pneg %p676
      $region66: #{tpu_custom_call.1} parent=5 // pred_check_branch
        %679 = sbr.rel (%p677) target = $region68
      $region67: #{tpu_custom_call.1} parent=5 // pred_region
        %s680 = ssub.s32 %s17, 2
        // Predicated region
        $region69: #{tpu_custom_call.1} parent=67 // pred_check
          %p681 = pneg %p217
        $region70: #{tpu_custom_call.1} parent=67 // pred_check_branch
          %683 = sbr.rel (%p681) target = $region72
        $region71: #{tpu_custom_call.1} parent=67 // pred_region
          %p684 = scmp.lt.s32.totalorder %s28, 1
          %s685 = scalar_select %p684, %s28, 1
          %s686 = smul.addr %s685, 8
          %s687 = scalar_lea.vmem %s7, %s686
        $region72: #{tpu_custom_call.1} parent=67 // pred_fallthru
          _
      $region68: #{tpu_custom_call.1} parent=5 // pred_fallthru
        _
    $region6: #{tpu_custom_call.1} parent=1 // loop_footer
      %s21 = sadd.s32 1, %s17
    $region7: #{tpu_custom_call.1} parent=1 // loop_footer_branch
      %16 = sbr.rel target = $region3
    $region8: #{tpu_custom_call.1} parent=1 // loop_exit
      _
    %688 = vsyncpa [#allocation5], 1
    %s689 = scalar_lea.sflag [#allocation5], 1
    %690 = vsyncpa %s689, 1

</llo_original>
